<compile_context>
chip_gen: v7x
topology: tpu7x:2x2x1
jax: 0.10.0
libtpu: 0.0.40
codegen_flags: <defaults>
</compile_context>

<pallas_src>
import functools

import jax
import jax.numpy as jnp
from jax.experimental import pallas as pl
from jax.experimental.pallas import tpu as pltpu

LANES = 128
SUBLANES = 8
ALIGN = SUBLANES * LANES  # 1024


def _device_tuning():
    """Returns (max_tm_rows, num_shards, vmem_limit_bytes) per TPU generation."""
    kind = ""
    try:
        kind = jax.devices()[0].device_kind.lower()
    except Exception:
        pass
    if "v7" in kind:
        # 2 TensorCores/chip, 64 MiB physical VMEM per TC -> leave headroom
        # for the f32 elementwise temporaries of a 4096-row tile.
        return 4096, 2, 48 * 1024 * 1024
    if "v6" in kind or "trillium" in kind:
        return 4096, 1, 64 * 1024 * 1024
    if "v5" in kind:
        return 2048, 1, 32 * 1024 * 1024
    return 2048, 1, None


def _dice_bce_partials_kernel(x_ref, t_ref, o_ref, *,
                              rows, tm, tiles_per_shard, total_tiles,
                              has_overhang, has_partial_tail_tile):
    s = pl.program_id(0)   # shard (parallel across TensorCores on v7x)
    j = pl.program_id(1)   # tile within shard (sequential reduction axis)
    g = s * tiles_per_shard + j  # nominal global tile index

    @pl.when(j == 0)
    def _():
        o_ref[...] = jnp.zeros_like(o_ref)

    def accumulate(x, t, valid=None):
        # One exp(-|x|) feeds both the sigmoid and the stable BCE softplus.
        e = jnp.exp(-jnp.abs(x))
        z = 1.0 + e
        inv_z = 1.0 / z
        p = jnp.where(x >= 0.0, inv_z, e * inv_z)          # sigmoid(x)
        bce = jnp.maximum(x, 0.0) - x * t + jnp.log1p(e)   # BCE with logits
        if valid is not None:
            # Select-based masking (not multiply): OOB garbage may be NaN/Inf.
            zeros = jnp.zeros_like(p)
            p = jnp.where(valid, p, zeros)
            t = jnp.where(valid, t, zeros)
            bce = jnp.where(valid, bce, zeros)

        def part(v):
            # (tm, 128) -> (8, 128): reduce only along the leading axis ->
            # pure VPU adds, no cross-lane XLU work on the hot path.
            return jnp.sum(v.reshape(tm // SUBLANES, SUBLANES, LANES), axis=0)

        o_ref[0, 0] += part(p * t)    # intersection sum(p * t)
        o_ref[0, 1] += part(p)        # sum(probs)
        o_ref[0, 2] += part(t)        # sum(targets)
        o_ref[0, 3] += part(bce)      # sum(per-element BCE)

    def body():
        x = x_ref[...].astype(jnp.float32)   # (tm, 128)
        t = t_ref[...].astype(jnp.float32)
        if has_partial_tail_tile:
            is_last = g == total_tiles - 1

            @pl.when(jnp.logical_not(is_last))
            def _():
                accumulate(x, t)

            @pl.when(is_last)
            def _():
                row = jax.lax.broadcasted_iota(jnp.int32, (tm, LANES), 0)
                valid = (g * tm + row) < rows
                accumulate(x, t, valid)
        else:
            accumulate(x, t)

    if has_overhang:
        # Overhanging steps of the last shard map (clamped) to the previous
        # block index -> no re-DMA; just skip the compute.
        pl.when(g < total_tiles)(body)
    else:
        body()


def dice_bce_from_logits(logits, targets, *, bce_weight=0.5, dice_weight=0.5,
                         smooth=1e-6):
    """Pallas equivalent of DiceBCE_fromLogits.forward(logits, targets)."""
    # TODO(synk): BCEWithLogitsLoss pos_weight is not supported (module default is None).
    assert logits.shape == targets.shape
    n = int(logits.size)
    assert n > 0

    # Native dtype all the way to the kernel (cast happens in-kernel); callers
    # may pass bf16/int8 targets to halve HBM traffic for that input.
    xf = jnp.reshape(logits, (-1,))
    tf = jnp.reshape(targets, (-1,))

    n_aligned = (n // ALIGN) * ALIGN

    inter = jnp.float32(0.0)
    psum = jnp.float32(0.0)
    tsum = jnp.float32(0.0)
    bce_sum = jnp.float32(0.0)

    if n_aligned > 0:
        rows = n_aligned // LANES                      # multiple of 8
        x_pref = xf if n_aligned == n else xf[:n_aligned]
        t_pref = tf if n_aligned == n else tf[:n_aligned]
        x2 = x_pref.reshape(rows, LANES)
        t2 = t_pref.reshape(rows, LANES)

        max_tm, num_shards, vmem_limit = _device_tuning()
        tm = min(max_tm, rows)                         # multiple of 8
        total_tiles = pl.cdiv(rows, tm)
        num_shards = max(1, min(num_shards, total_tiles))
        tiles_per_shard = pl.cdiv(total_tiles, num_shards)
        has_overhang = num_shards * tiles_per_shard > total_tiles
        has_partial = (rows % tm) != 0

        if has_overhang:
            def in_map(s, j):
                return (jnp.minimum(s * tiles_per_shard + j, total_tiles - 1), 0)
        else:
            def in_map(s, j):
                return (s * tiles_per_shard + j, 0)

        kernel = functools.partial(
            _dice_bce_partials_kernel, rows=rows, tm=tm,
            tiles_per_shard=tiles_per_shard, total_tiles=total_tiles,
            has_overhang=has_overhang, has_partial_tail_tile=has_partial)

        cp_kwargs = dict(dimension_semantics=("parallel", "arbitrary"))
        if vmem_limit is not None:
            cp_kwargs["vmem_limit_bytes"] = vmem_limit

        partials = pl.pallas_call(
            kernel,
            out_shape=jax.ShapeDtypeStruct((num_shards, 4, SUBLANES, LANES),
                                           jnp.float32),
            grid_spec=pltpu.PrefetchScalarGridSpec(
                num_scalar_prefetch=0,
                grid=(num_shards, tiles_per_shard),
                in_specs=[
                    pl.BlockSpec((tm, LANES), in_map),
                    pl.BlockSpec((tm, LANES), in_map),
                ],
                out_specs=pl.BlockSpec((1, 4, SUBLANES, LANES),
                                       lambda s, j: (s, 0, 0, 0)),
            ),
            compiler_params=pltpu.CompilerParams(**cp_kwargs),
        )(x2, t2)

        # Tiny final collapse (<= 8K floats) in the wrapper.
        sums = jnp.sum(partials, axis=(0, 2, 3))       # (4,)
        inter, psum, tsum, bce_sum = sums[0], sums[1], sums[2], sums[3]

    if n_aligned != n:
        # Ragged tail (< 1024 elements): finish in plain JAX instead of
        # padding/copying the full arrays.
        xt = xf[n_aligned:].astype(jnp.float32)
        tt = tf[n_aligned:].astype(jnp.float32)
        et = jnp.exp(-jnp.abs(xt))
        zt = 1.0 + et
        pt = jnp.where(xt >= 0.0, 1.0 / zt, et / zt)
        inter = inter + jnp.sum(pt * tt)
        psum = psum + jnp.sum(pt)
        tsum = tsum + jnp.sum(tt)
        bce_sum = bce_sum + jnp.sum(
            jnp.maximum(xt, 0.0) - xt * tt + jnp.log1p(et))

    dice = (2.0 * inter + smooth) / (psum + tsum + smooth)
    dice_loss = 1.0 - dice
    bce_mean = bce_sum / n
    return bce_weight * bce_mean + dice_weight * dice_loss


def _reference(logits, targets, bce_weight=0.5, dice_weight=0.5, smooth=1e-6):
    x = logits.astype(jnp.float32).reshape(-1)
    t = targets.astype(jnp.float32).reshape(-1)
    p = jax.nn.sigmoid(x)
    inter = jnp.sum(p * t)
    dice = (2.0 * inter + smooth) / (jnp.sum(p) + jnp.sum(t) + smooth)
    bce = jnp.mean(jnp.maximum(x, 0.0) - x * t + jnp.log1p(jnp.exp(-jnp.abs(x))))
    return bce_weight * bce + dice_weight * (1.0 - dice)


if __name__ == "__main__":
    key = jax.random.PRNGKey(0)

    # Main check: NCHW-style segmentation shape (batch=2, channels=4, 16x16).
    k1, k2 = jax.random.split(key)
    logits = jax.random.normal(k1, (2, 4, 16, 16), dtype=jnp.float32)
    targets = (jax.random.uniform(k2, (2, 4, 16, 16)) > 0.5).astype(jnp.float32)
    loss = jax.block_until_ready(dice_bce_from_logits(logits, targets))
    ref = _reference(logits, targets)
    assert jnp.allclose(loss, ref, atol=1e-5, rtol=1e-4), (loss, ref)

    # Extra check: non-1024-aligned element count (exercises the JAX tail path).
    k3, k4 = jax.random.split(k2)
    l2 = jax.random.normal(k3, (2, 3, 40, 40), dtype=jnp.float32)      # 9600 elems
    t2 = (jax.random.uniform(k4, (2, 3, 40, 40)) > 0.5).astype(jnp.float32)
    loss2 = jax.block_until_ready(dice_bce_from_logits(l2, t2))
    ref2 = _reference(l2, t2)
    assert jnp.allclose(loss2, ref2, atol=1e-5, rtol=1e-4), (loss2, ref2)

    # Extra check: multi-tile grid with a partial last tile (masked tail path).
    k5, k6 = jax.random.split(k4)
    l3 = jax.random.normal(k5, (1, 1, 520, 512), dtype=jnp.float32)    # 2080 rows
    t3 = (jax.random.uniform(k6, (1, 1, 520, 512)) > 0.5).astype(jnp.float32)
    loss3 = jax.block_until_ready(dice_bce_from_logits(l3, t3))
    ref3 = _reference(l3, t3)
    assert jnp.allclose(loss3, ref3, atol=1e-5, rtol=1e-4), (loss3, ref3)

    print("KERNEL_OK")
</pallas_src>

<mosaic_0001>
module attributes {stable_mosaic.version = 11 : i64} {
  func.func @_dice_bce_partials_kernel(%arg0: i32, %arg1: i32, %arg2: memref<16x128xf32, #tpu.memory_space<vmem>>, %arg3: memref<16x128xf32, #tpu.memory_space<vmem>>, %arg4: memref<1x4x8x128xf32, #tpu.memory_space<vmem>>) attributes {dimension_semantics = [#tpu.dimension_semantics<parallel>, #tpu.dimension_semantics<arbitrary>], iteration_bounds = array<i64: 1, 1>, scalar_prefetch = 0 : i64, scratch_operands = 0 : i64, tpu.core_type = #tpu.core_type<tc>, window_params = [{transform_indices = @transform_0, window_bounds = array<i64: 16, 128>}, {transform_indices = @transform_1, window_bounds = array<i64: 16, 128>}, {transform_indices = @transform_2, window_bounds = array<i64: 1, 4, 8, 128>}]} {
    %c0_i32 = arith.constant 0 : i32
    %0 = arith.cmpi eq, %arg1, %c0_i32 : i32
    %1 = arith.extui %0 : i1 to i32
    %c0_i32_0 = arith.constant 0 : i32
    %2 = arith.cmpi ne, %1, %c0_i32_0 : i32
    scf.if %2 {
      %cst_41 = arith.constant 0.000000e+00 : f32
      %56 = vector.broadcast %cst_41 : f32 to vector<1x4x8x128xf32>
      %c0_42 = arith.constant 0 : index
      %c0_43 = arith.constant 0 : index
      %c0_44 = arith.constant 0 : index
      %c0_45 = arith.constant 0 : index
      %57 = vector.load %arg4[%c0_42, %c0_43, %c0_44, %c0_45] : memref<1x4x8x128xf32, #tpu.memory_space<vmem>>, vector<1x4x8x128xf32>
      tpu.vector_store %arg4[%c0_42, %c0_43, %c0_44, %c0_45], %56 {strides = array<i32>} : memref<1x4x8x128xf32, #tpu.memory_space<vmem>>, vector<1x4x8x128xf32>,
    } else {
    }
    %c0 = arith.constant 0 : index
    %c0_1 = arith.constant 0 : index
    %3 = vector.load %arg2[%c0, %c0_1] : memref<16x128xf32, #tpu.memory_space<vmem>>, vector<16x128xf32>
    %c0_2 = arith.constant 0 : index
    %c0_3 = arith.constant 0 : index
    %4 = vector.load %arg3[%c0_2, %c0_3] : memref<16x128xf32, #tpu.memory_space<vmem>>, vector<16x128xf32>
    %5 = math.absf %3 : vector<16x128xf32>
    %cst = arith.constant 0.000000e+00 : f32
    %6 = vector.broadcast %cst : f32 to vector<16x128xf32>
    %7 = arith.subf %6, %5 : vector<16x128xf32>
    %8 = math.exp %7 : vector<16x128xf32>
    %cst_4 = arith.constant 1.000000e+00 : f32
    %9 = vector.broadcast %cst_4 : f32 to vector<16x128xf32>
    %10 = arith.addf %9, %8 : vector<16x128xf32>
    %cst_5 = arith.constant 1.000000e+00 : f32
    %11 = vector.broadcast %cst_5 : f32 to vector<16x128xf32>
    %12 = arith.divf %11, %10 : vector<16x128xf32>
    %cst_6 = arith.constant 0.000000e+00 : f32
    %13 = vector.broadcast %cst_6 : f32 to vector<16x128xf32>
    %14 = arith.cmpf oge, %3, %13 : vector<16x128xf32>
    %15 = arith.mulf %8, %12 : vector<16x128xf32>
    %16 = arith.select %14, %12, %15 : vector<16x128xi1>, vector<16x128xf32>
    %cst_7 = arith.constant 0.000000e+00 : f32
    %17 = vector.broadcast %cst_7 : f32 to vector<16x128xf32>
    %18 = arith.maximumf %3, %17 : vector<16x128xf32>
    %19 = arith.mulf %3, %4 : vector<16x128xf32>
    %20 = arith.subf %18, %19 : vector<16x128xf32>
    %21 = math.log1p %8 : vector<16x128xf32>
    %22 = arith.addf %20, %21 : vector<16x128xf32>
    %c0_8 = arith.constant 0 : index
    %c0_9 = arith.constant 0 : index
    %c0_10 = arith.constant 0 : index
    %c0_11 = arith.constant 0 : index
    %23 = vector.load %arg4[%c0_8, %c0_9, %c0_10, %c0_11] : memref<1x4x8x128xf32, #tpu.memory_space<vmem>>, vector<1x1x8x128xf32>
    %24 = vector.shape_cast %23 : vector<1x1x8x128xf32> to vector<8x128xf32>
    %25 = arith.mulf %16, %4 : vector<16x128xf32>
    %26 = vector.shape_cast %25 : vector<16x128xf32> to vector<2x8x128xf32>
    %cst_12 = arith.constant dense<0.000000e+00> : vector<8x128xf32>
    %27 = vector.multi_reduction <add>, %26, %cst_12 [0] : vector<2x8x128xf32> to vector<8x128xf32>
    %28 = arith.addf %24, %27 : vector<8x128xf32>
    %c0_13 = arith.constant 0 : index
    %c0_14 = arith.constant 0 : index
    %c0_15 = arith.constant 0 : index
    %c0_16 = arith.constant 0 : index
    %29 = vector.load %arg4[%c0_13, %c0_14, %c0_15, %c0_16] : memref<1x4x8x128xf32, #tpu.memory_space<vmem>>, vector<1x1x8x128xf32>
    %30 = vector.shape_cast %29 : vector<1x1x8x128xf32> to vector<8x128xf32>
    %31 = vector.shape_cast %28 : vector<8x128xf32> to vector<1x1x8x128xf32>
    tpu.vector_store %arg4[%c0_13, %c0_14, %c0_15, %c0_16], %31 {strides = array<i32>} : memref<1x4x8x128xf32, #tpu.memory_space<vmem>>, vector<1x1x8x128xf32>,
    %c0_17 = arith.constant 0 : index
    %c1 = arith.constant 1 : index
    %c0_18 = arith.constant 0 : index
    %c0_19 = arith.constant 0 : index
    %32 = vector.load %arg4[%c0_17, %c1, %c0_18, %c0_19] : memref<1x4x8x128xf32, #tpu.memory_space<vmem>>, vector<1x1x8x128xf32>
    %33 = vector.shape_cast %32 : vector<1x1x8x128xf32> to vector<8x128xf32>
    %34 = vector.shape_cast %16 : vector<16x128xf32> to vector<2x8x128xf32>
    %cst_20 = arith.constant dense<0.000000e+00> : vector<8x128xf32>
    %35 = vector.multi_reduction <add>, %34, %cst_20 [0] : vector<2x8x128xf32> to vector<8x128xf32>
    %36 = arith.addf %33, %35 : vector<8x128xf32>
    %c0_21 = arith.constant 0 : index
    %c1_22 = arith.constant 1 : index
    %c0_23 = arith.constant 0 : index
    %c0_24 = arith.constant 0 : index
    %37 = vector.load %arg4[%c0_21, %c1_22, %c0_23, %c0_24] : memref<1x4x8x128xf32, #tpu.memory_space<vmem>>, vector<1x1x8x128xf32>
    %38 = vector.shape_cast %37 : vector<1x1x8x128xf32> to vector<8x128xf32>
    %39 = vector.shape_cast %36 : vector<8x128xf32> to vector<1x1x8x128xf32>
    tpu.vector_store %arg4[%c0_21, %c1_22, %c0_23, %c0_24], %39 {strides = array<i32>} : memref<1x4x8x128xf32, #tpu.memory_space<vmem>>, vector<1x1x8x128xf32>,
    %c0_25 = arith.constant 0 : index
    %c2 = arith.constant 2 : index
    %c0_26 = arith.constant 0 : index
    %c0_27 = arith.constant 0 : index
    %40 = vector.load %arg4[%c0_25, %c2, %c0_26, %c0_27] : memref<1x4x8x128xf32, #tpu.memory_space<vmem>>, vector<1x1x8x128xf32>
    %41 = vector.shape_cast %40 : vector<1x1x8x128xf32> to vector<8x128xf32>
    %42 = vector.shape_cast %4 : vector<16x128xf32> to vector<2x8x128xf32>
    %cst_28 = arith.constant dense<0.000000e+00> : vector<8x128xf32>
    %43 = vector.multi_reduction <add>, %42, %cst_28 [0] : vector<2x8x128xf32> to vector<8x128xf32>
    %44 = arith.addf %41, %43 : vector<8x128xf32>
    %c0_29 = arith.constant 0 : index
    %c2_30 = arith.constant 2 : index
    %c0_31 = arith.constant 0 : index
    %c0_32 = arith.constant 0 : index
    %45 = vector.load %arg4[%c0_29, %c2_30, %c0_31, %c0_32] : memref<1x4x8x128xf32, #tpu.memory_space<vmem>>, vector<1x1x8x128xf32>
    %46 = vector.shape_cast %45 : vector<1x1x8x128xf32> to vector<8x128xf32>
    %47 = vector.shape_cast %44 : vector<8x128xf32> to vector<1x1x8x128xf32>
    tpu.vector_store %arg4[%c0_29, %c2_30, %c0_31, %c0_32], %47 {strides = array<i32>} : memref<1x4x8x128xf32, #tpu.memory_space<vmem>>, vector<1x1x8x128xf32>,
    %c0_33 = arith.constant 0 : index
    %c3 = arith.constant 3 : index
    %c0_34 = arith.constant 0 : index
    %c0_35 = arith.constant 0 : index
    %48 = vector.load %arg4[%c0_33, %c3, %c0_34, %c0_35] : memref<1x4x8x128xf32, #tpu.memory_space<vmem>>, vector<1x1x8x128xf32>
    %49 = vector.shape_cast %48 : vector<1x1x8x128xf32> to vector<8x128xf32>
    %50 = vector.shape_cast %22 : vector<16x128xf32> to vector<2x8x128xf32>
    %cst_36 = arith.constant dense<0.000000e+00> : vector<8x128xf32>
    %51 = vector.multi_reduction <add>, %50, %cst_36 [0] : vector<2x8x128xf32> to vector<8x128xf32>
    %52 = arith.addf %49, %51 : vector<8x128xf32>
    %c0_37 = arith.constant 0 : index
    %c3_38 = arith.constant 3 : index
    %c0_39 = arith.constant 0 : index
    %c0_40 = arith.constant 0 : index
    %53 = vector.load %arg4[%c0_37, %c3_38, %c0_39, %c0_40] : memref<1x4x8x128xf32, #tpu.memory_space<vmem>>, vector<1x1x8x128xf32>
    %54 = vector.shape_cast %53 : vector<1x1x8x128xf32> to vector<8x128xf32>
    %55 = vector.shape_cast %52 : vector<8x128xf32> to vector<1x1x8x128xf32>
    tpu.vector_store %arg4[%c0_37, %c3_38, %c0_39, %c0_40], %55 {strides = array<i32>} : memref<1x4x8x128xf32, #tpu.memory_space<vmem>>, vector<1x1x8x128xf32>,
    return
  }
  func.func @transform_0(%arg0: i32, %arg1: i32) -> (i32, i32) {
    %c1_i32 = arith.constant 1 : i32
    %0 = arith.muli %arg0, %c1_i32 : i32
    %1 = arith.addi %0, %arg1 : i32
    %c0_i32 = arith.constant 0 : i32
    %c0_i32_0 = arith.constant 0 : i32
    return %1, %c0_i32 : i32, i32
  }
  func.func @transform_1(%arg0: i32, %arg1: i32) -> (i32, i32) {
    %c1_i32 = arith.constant 1 : i32
    %0 = arith.muli %arg0, %c1_i32 : i32
    %1 = arith.addi %0, %arg1 : i32
    %c0_i32 = arith.constant 0 : i32
    %c0_i32_0 = arith.constant 0 : i32
    return %1, %c0_i32 : i32, i32
  }
  func.func @transform_2(%arg0: i32, %arg1: i32) -> (i32, i32, i32, i32) {
    %c0_i32 = arith.constant 0 : i32
    %c0_i32_0 = arith.constant 0 : i32
    %c0_i32_1 = arith.constant 0 : i32
    %c0_i32_2 = arith.constant 0 : i32
    return %arg0, %c0_i32, %c0_i32_0, %c0_i32_1 : i32, i32, i32, i32
  }
}

</mosaic_0001>

<llo_original>
// kernel: tpu_custom_call.1
$region0: #{tpu_custom_call.1}
  #allocation0 [shape = 'u32[]', space=smem, size = 0x4, offset = 0x4, fixed_abs, tag = 'smem constant byte address 0x4 - core index']
  #allocation1 [shape = 'u32[144,128]{1,0:T(1,128)}', space=vmem, size = 0x12000, scoped, tag = 'internal scratch']
  %s0 = inlined_call_operand.hbm [shape: f32[16,128], index: 0, kind: input, shape index: {}]
  %s1 = inlined_call_operand.hbm [shape: f32[16,128], index: 1, kind: input, shape index: {}]
  %s2 = inlined_call_operand.hbm [shape: f32[1,4,8,128], index: 2, kind: output, shape index: {}]
  %s3 = sld [smem:[#allocation0]]
  $region30: #{tpu_custom_call.1} parent=0
    _
  %s5 = ssub.s32 1, %s3
  %s6 = scalar_select 0, %s5, %s3
  $region1: #{tpu_custom_call.1} parent=0
    #allocation2 [shape = 'u8[8192]{0}', space=vmem, size = 0x2000, scoped, tag = 'input window, operand 0, single buffered']
    #allocation3 [shape = 's32[1]{0}', space=sflag, size = 0x4, scoped, tag = 'scoped memory for tpu_custom_call.1']
    #allocation4 [shape = 's32[1]{0}', space=sflag, size = 0x4, scoped, tag = 'scoped memory for tpu_custom_call.1']
    #allocation5 [shape = 'u8[8192]{0}', space=vmem, size = 0x2000, scoped, tag = 'input window, operand 1, single buffered']
    #allocation6 [shape = 's32[1]{0}', space=sflag, size = 0x4, scoped, tag = 'scoped memory for tpu_custom_call.1']
    #allocation7 [shape = 'u8[16384]{0}', space=vmem, size = 0x4000, scoped, tag = 'output window, operand 0, single buffered']
    %7 = vsyncpa [#allocation3], 0
    %8 = vsyncpa [#allocation6], 0
    %9 = vsyncpa [#allocation4], 0
    // Predicated region
    $region2: #{tpu_custom_call.1} parent=1 // pred_check
      _
    $region3: #{tpu_custom_call.1} parent=1 // pred_check_branch
      %11 = sbr.rel (0) target = $region5
    $region4: #{tpu_custom_call.1} parent=1 // pred_region
      %s12 = sadd.s32 0, 0
      %s13 = smul.u32 2, %s12
      %s15 = ssub.s32 256, 256
      %16 = vsyncadd [#allocation3], %s15
      %s17 = smul.addr %s13, 128
      %s18 = scalar_lea.hbm %s0, %s17
      %s19 = sshll.u32 [#allocation2], 4
      %s20 = int_to_ptr.vmem [resolvable:$true] %s19
      %25 = dma.hbm_to_vmem [thread:$0]  %s18, 256, %s20, [#allocation3], 128, 128, 8
    $region5: #{tpu_custom_call.1} parent=1 // pred_fallthru
      _
    // Predicated region
    $region6: #{tpu_custom_call.1} parent=1 // pred_check
      _
    $region7: #{tpu_custom_call.1} parent=1 // pred_check_branch
      %27 = sbr.rel (0) target = $region9
    $region8: #{tpu_custom_call.1} parent=1 // pred_region
      %s28 = sadd.s32 0, 0
      %s29 = smul.u32 2, %s28
      %s31 = ssub.s32 256, 256
      %32 = vsyncadd [#allocation6], %s31
      %s33 = smul.addr %s29, 128
      %s34 = scalar_lea.hbm %s1, %s33
      %s35 = sshll.u32 [#allocation5], 4
      %s36 = int_to_ptr.vmem [resolvable:$true] %s35
      %41 = dma.hbm_to_vmem [thread:$0]  %s34, 256, %s36, [#allocation6], 128, 128, 8
    $region9: #{tpu_custom_call.1} parent=1 // pred_fallthru
      _
    // Predicated region
    $region10: #{tpu_custom_call.1} parent=1 // pred_check
      _
    $region11: #{tpu_custom_call.1} parent=1 // pred_check_branch
      %43 = sbr.rel (0) target = $region13
    $region12: #{tpu_custom_call.1} parent=1 // pred_region
      %44 = dma.done [#allocation3], 256
    $region13: #{tpu_custom_call.1} parent=1 // pred_fallthru
      _
    // Predicated region
    $region14: #{tpu_custom_call.1} parent=1 // pred_check
      _
    $region15: #{tpu_custom_call.1} parent=1 // pred_check_branch
      %46 = sbr.rel (0) target = $region17
    $region16: #{tpu_custom_call.1} parent=1 // pred_region
      %47 = dma.done [#allocation6], 256
    $region17: #{tpu_custom_call.1} parent=1 // pred_fallthru
      _
    %s48 = sadd.s32 0, 0
    %s49 = smul.u32 2, %s48
    %s50 = sadd.s32 0, 0
    %s51 = smul.u32 2, %s50
    %p52 = scmp.eq.s32.totalorder 0, 0
    // Predicated region
    $region18: #{tpu_custom_call.1} parent=1 // pred_check
      %p53 = pneg %p52
    $region19: #{tpu_custom_call.1} parent=1 // pred_check_branch
      %55 = sbr.rel (%p53) target = $region21
    $region20: #{tpu_custom_call.1} parent=1 // pred_region
      %56 = vst [vmem:[#allocation7] sm:$0xff] 0.0
      %57 = vst [vmem:[#allocation7 + $0x8] sm:$0xff] 0.0
      %58 = vst [vmem:[#allocation7 + $0x10] sm:$0xff] 0.0
      %59 = vst [vmem:[#allocation7 + $0x18] sm:$0xff] 0.0
    $region21: #{tpu_custom_call.1} parent=1 // pred_fallthru
      _
    %v60 = vld [vmem:[#allocation2] sm:$0xff]
    %v61 = vld [vmem:[#allocation2 + $0x8] sm:$0xff]
    %v62 = vld [vmem:[#allocation5] sm:$0xff]
    %v63 = vld [vmem:[#allocation5 + $0x8] sm:$0xff]
    %v64 = vand.u32 2147483647, %v60
    %v65 = vand.u32 2147483647, %v61
    %v66 = vsub.f32 0.0, %v64
    %v67 = vsub.f32 0.0, %v65
    %v68 = vmul.f32 %v66, 1.442695
    %v69 = vpow.pop %v68
    %v70 = vmul.f32 %v67, 1.442695
    %v71 = vpow.pop %v70
    %v72 = vadd.f32 %v69, 1.0
    %v73 = vadd.f32 %v71, 1.0
    %v74 = vrcp.pop %v72
    %v75 = vmul.f32 1.0, %v74
    %v76 = vrcp.pop %v73
    %v77 = vmul.f32 1.0, %v76
    %vm78 = vcmp.ge.f32.partialorder %v60, 0.0
    %vm79 = vcmp.ge.f32.partialorder %v61, 0.0
    %v80 = vmul.f32 %v69, %v75
    %v81 = vmul.f32 %v71, %v77
    %v82 = vsel %vm78, %v75, %v80
    %v83 = vsel %vm79, %v77, %v81
    %v84 = vmax.f32 %v60, 0.0
    %v85 = vmax.f32 %v61, 0.0
    %v86 = vmul.f32 %v60, %v62
    %v87 = vmul.f32 %v61, %v63
    %v88 = vsub.f32 %v84, %v86
    %v89 = vsub.f32 %v85, %v87
    %v90 = vadd.f32 %v69, 1.0
    %v91 = vlog2.pop %v90
    %v92 = vmul.f32 %v91, 0.6931472
    %v93 = vmul.f32 -0.5, %v69
    %v94 = vadd.f32 %v93, 1.0
    %v95 = vmul.f32 %v94, %v69
    %v96 = vand.u32 2147483647, %v69
    %vm97 = vcmp.lt.f32.partialorder %v96, 0.0004427343
    %v98 = vsel %vm97, %v95, %v92
    %v99 = vadd.f32 %v71, 1.0
    %v100 = vlog2.pop %v99
    %v101 = vmul.f32 %v100, 0.6931472
    %v102 = vmul.f32 -0.5, %v71
    %v103 = vadd.f32 %v102, 1.0
    %v104 = vmul.f32 %v103, %v71
    %v105 = vand.u32 2147483647, %v71
    %vm106 = vcmp.lt.f32.partialorder %v105, 0.0004427343
    %v107 = vsel %vm106, %v104, %v101
    %v108 = vadd.f32 %v88, %v98
    %v109 = vadd.f32 %v89, %v107
    %v110 = vld [vmem:[#allocation7] sm:$0xff]
    %v111 = vmul.f32 %v82, %v62
    %v112 = vmul.f32 %v83, %v63
    %v113 = vadd.f32 %v111, %v112
    %v114 = vadd.f32 %v110, %v113
    %115 = vst [vmem:[#allocation7] sm:$0xff] %v114
    %s116 = scalar_lea.vmem [#allocation7], 8
    %v117 = vld [vmem:[%s116] sm:$0xff]
    %v118 = vadd.f32 %v82, %v83
    %v119 = vadd.f32 %v117, %v118
    %120 = vst [vmem:[%s116] sm:$0xff] %v119
    %s121 = scalar_lea.vmem [#allocation7], 16
    %v122 = vld [vmem:[%s121] sm:$0xff]
    %v123 = vadd.f32 %v62, %v63
    %v124 = vadd.f32 %v122, %v123
    %125 = vst [vmem:[%s121] sm:$0xff] %v124
    %s126 = scalar_lea.vmem [#allocation7], 24
    %v127 = vld [vmem:[%s126] sm:$0xff]
    %v128 = vadd.f32 %v108, %v109
    %v129 = vadd.f32 %v127, %v128
    %130 = vst [vmem:[%s126] sm:$0xff] %v129
    // Predicated region
    $region22: #{tpu_custom_call.1} parent=1 // pred_check
      _
    $region23: #{tpu_custom_call.1} parent=1 // pred_check_branch
      %132 = sbr.rel (0) target = $region25
    $region24: #{tpu_custom_call.1} parent=1 // pred_region
      %s134 = ssub.s32 512, 512
      %135 = vsyncadd [#allocation4], %s134
      %s136 = sshll.u32 [#allocation7], 4
      %s137 = int_to_ptr.vmem [resolvable:$true] %s136
      %142 = dma.vmem_to_hbm [thread:$0]  %s137, 512, %s2, [#allocation4], 128, 128, 8
    $region25: #{tpu_custom_call.1} parent=1 // pred_fallthru
      _
    // Predicated region
    $region26: #{tpu_custom_call.1} parent=1 // pred_check
      _
    $region27: #{tpu_custom_call.1} parent=1 // pred_check_branch
      %144 = sbr.rel (0) target = $region29
    $region28: #{tpu_custom_call.1} parent=1 // pred_region
      %145 = dma.done [#allocation4], 512
    $region29: #{tpu_custom_call.1} parent=1 // pred_fallthru
      _
    %146 = vsyncpa [#allocation3], 1
    %147 = vsyncpa [#allocation6], 1
    %148 = vsyncpa [#allocation4], 1

</llo_original>
